<compile_context>
chip_gen: v7x
topology: tpu7x:2x2x1
jax: 0.10.0
libtpu: 0.0.40
codegen_flags: <defaults>
</compile_context>

<pallas_src>
import jax
import jax.numpy as jnp
from jax import lax
from jax.experimental import pallas as pl
from jax.experimental.pallas import tpu as pltpu

_MIB = 1 << 20


def _is_megacore_part():
    """True when 'parallel' grid axes are sharded across >1 TensorCore per chip."""
    try:
        kind = jax.devices()[0].device_kind.lower()
        return any(tag in kind for tag in ("v7", "tpu7", "v5p", "v4"))
    except Exception:
        return True  # assume megacore; worst case a little extra per-step overhead


def _largest_divisor_leq(m, cap):
    cap = max(1, min(cap, m))
    for d in range(cap, 0, -1):
        if m % d == 0:
            return d
    return 1


def _make_mlp_kernel(nb, lane_chunk, n_chunks):
    def kernel(x_ref, w1t_ref, b1_ref, w2t_ref, b2_ref, o_ref):
        # x_ref:   (nb, Cin, tile)  pixels lane-dense, channels on sublanes
        # w1t_ref: (Hid, Cin)  bf16          b1_ref: (Hid, 1)  f32
        # w2t_ref: (Cout, Hid) bf16 (StarReLU scale folded)   b2_ref: (Cout, 1) f32
        # o_ref:   (nb, Cout, tile)
        for n in range(nb):  # static; nb > 1 only for the collapsed tiny-workload case
            def chunk(c, carry):
                off = c * lane_chunk
                if not isinstance(off, int):
                    off = pl.multiple_of(off, 128)
                x = x_ref[n, :, pl.ds(off, lane_chunk)]
                if x.dtype != jnp.bfloat16:
                    x = x.astype(jnp.bfloat16)  # no-op when the producer supplies bf16
                # MXU matmuls, f32 accumulation.  At tiny Cin/Hid these are latency-only;
                # kernel is HBM-bound so that's acceptable (see perf notes above).
                h = jnp.dot(w1t_ref[...], x,
                            preferred_element_type=jnp.float32) + b1_ref[...]
                r = jnp.maximum(h, 0.0)
                r2 = (r * r).astype(jnp.bfloat16)          # StarReLU scale lives in W2'
                y = jnp.dot(w2t_ref[...], r2,
                            preferred_element_type=jnp.float32) + b2_ref[...]
                o_ref[n, :, pl.ds(off, lane_chunk)] = y.astype(o_ref.dtype)
                return carry

            if n_chunks == 1:
                chunk(0, 0)
            else:
                # Chunk the lane axis so the f32 hidden intermediate never spills.
                lax.fori_loop(0, n_chunks, chunk, 0, unroll=True)
    return kernel


def mlp_block_pallas(x_nchw, w1, b1, w2, b2, sr_scale, sr_bias, *,
                     pix_tile=1024, out_dtype=None, lane_chunk=None,
                     vmem_budget_bytes=48 * _MIB):
    """x_nchw: (N, C, H, W). w1: (Cin, Hid), b1: (Hid,), w2: (Hid, Cout), b2: (Cout,).

    For best performance pass x in bf16 and out_dtype=jnp.bfloat16 (halves HBM traffic
    of this memory-bound kernel).  Default keeps the module's dtype for parity.
    """
    N, Cin, H, W = x_nchw.shape
    Hid = w1.shape[1]
    Cout = w2.shape[1]
    P = H * W
    out_dtype = x_nchw.dtype if out_dtype is None else out_dtype

    # --- layout: keep NCHW flat; pad H*W up to a multiple of 128 so all stores are
    # unmasked lane-dense vst.  (P=256 in the toy config -> no pad.)
    # TODO(synk): at MetaFormer stage sizes (P=3136/784/196/49) produce the padded
    # (N, C, P_pad) layout upstream to avoid this one extra pad pass.
    P_pad = ((P + 127) // 128) * 128
    x3d = x_nchw.reshape(N, Cin, P)
    if P_pad != P:
        x3d = jnp.pad(x3d, ((0, 0), (0, 0), (0, P_pad - P)))

    x_item = jnp.dtype(x3d.dtype).itemsize
    o_item = jnp.dtype(out_dtype).itemsize

    # --- fold StarReLU (s*relu(.)^2 + t) into layer 2 at trace time:
    #   (s*r2 + t) @ W2 + b2 == r2 @ (s*W2) + (b2 + t * sum_k W2[k, :])
    w1f = jnp.asarray(w1, jnp.float32)
    w2f = jnp.asarray(w2, jnp.float32)
    w1t = w1f.T.astype(jnp.bfloat16)                            # (Hid, Cin)
    w2t = (jnp.float32(sr_scale) * w2f).T.astype(jnp.bfloat16)  # (Cout, Hid)
    b1c = jnp.asarray(b1, jnp.float32).reshape(Hid, 1)
    b2c = (jnp.asarray(b2, jnp.float32)
           + jnp.float32(sr_bias) * jnp.sum(w2f, axis=0)).reshape(Cout, 1)

    weight_bytes = (Hid * Cin + Cout * Hid) * 2 + (Hid + Cout) * 4
    # Single-buffer the grid-invariant weights once they are large enough to matter
    # (frees VMEM on the 64 MiB v7x part); irrelevant at toy widths so gated off there.
    single_buf_w = weight_bytes > 2 * _MIB
    w_buf = 1 if single_buf_w else 2

    # --- tile sizing from a VMEM budget that also fits v7x (64 MiB physical).
    per_pixel = 2 * (Cin * x_item + Cout * o_item)              # double-buffered in+out
    budget = vmem_budget_bytes - w_buf * weight_bytes - 4 * _MIB
    cap_pixels = max(128, (budget // max(per_pixel, 1)) // 128 * 128)
    tile_cap = min(max(128, (pix_tile // 128) * 128), cap_pixels)
    m = P_pad // 128
    tile = 128 * _largest_divisor_leq(m, tile_cap // 128)       # tile divides P_pad

    megacore = _is_megacore_part()
    num_tiles = P_pad // tile
    if megacore and N * num_tiles < 2 and m >= 2:
        # Ensure >= 2 grid steps so both TensorCores get work (small-batch/small-image).
        tile = 128 * _largest_divisor_leq(m, m // 2)
        num_tiles = P_pad // tile

    # On single-TC parts, collapse very small workloads into one grid step.
    nb = 1
    if (not megacore) and num_tiles == 1 and N * P_pad <= tile_cap:
        nb = N
    grid = (N // nb, num_tiles)

    # --- lane chunking of the hidden intermediate (keeps MXU, not vld/vst, binding).
    if lane_chunk is None:
        if Hid * tile * 4 <= 2 * _MIB:
            lane_chunk = tile
        else:
            lane_chunk = 128
            while (lane_chunk * 2 <= tile and tile % (lane_chunk * 2) == 0
                   and Hid * lane_chunk * 2 * 4 <= 512 * 1024):
                lane_chunk *= 2
    assert lane_chunk % 128 == 0 and tile % lane_chunk == 0
    n_chunks = tile // lane_chunk

    # --- explicit VMEM limit derived from the real footprint (don't rely on the 32 MiB
    # scoped default; stay under v7x's 64 MiB physical with headroom).
    footprint = (2 * nb * tile * (Cin * x_item + Cout * o_item)
                 + w_buf * weight_bytes
                 + 4 * Hid * lane_chunk * 4)
    vmem_limit = int(min(max(footprint + 8 * _MIB, 32 * _MIB), 56 * _MIB))

    w_kwargs = {"pipeline_mode": pl.Buffered(1)} if single_buf_w else {}

    out3d = pl.pallas_call(
        _make_mlp_kernel(nb, lane_chunk, n_chunks),
        out_shape=jax.ShapeDtypeStruct((N, Cout, P_pad), out_dtype),
        grid_spec=pltpu.PrefetchScalarGridSpec(
            num_scalar_prefetch=0,
            grid=grid,
            in_specs=[
                pl.BlockSpec((nb, Cin, tile), lambda n, p: (n, 0, p)),       # x tile
                pl.BlockSpec((Hid, Cin), lambda n, p: (0, 0), **w_kwargs),   # W1^T (resident)
                pl.BlockSpec((Hid, 1), lambda n, p: (0, 0)),                 # b1
                pl.BlockSpec((Cout, Hid), lambda n, p: (0, 0), **w_kwargs),  # W2'^T (resident)
                pl.BlockSpec((Cout, 1), lambda n, p: (0, 0)),                # b2'
            ],
            out_specs=pl.BlockSpec((nb, Cout, tile), lambda n, p: (n, 0, p)),
        ),
        compiler_params=pltpu.CompilerParams(
            dimension_semantics=("parallel", "parallel"),
            vmem_limit_bytes=vmem_limit),
    )(x3d, w1t, b1c, w2t, b2c)

    if P_pad != P:
        out3d = out3d[:, :, :P]
    return out3d.reshape(N, Cout, H, W)


if __name__ == "__main__":
    # MlpBlock(in_features=4, out_features=4, expand_ratio=4) -> hidden = 16
    N, Cin, H, W = 2, 4, 16, 16
    expand_ratio = 4
    Hid = int(expand_ratio * Cin)
    Cout = 4

    key = jax.random.PRNGKey(0)
    kx, k1, k2, k3, k4 = jax.random.split(key, 5)

    x = jax.random.normal(kx, (N, Cin, H, W), dtype=jnp.float32)
    # 1x1 conv weights as (in, out) matrices.
    w1 = jax.random.normal(k1, (Cin, Hid), dtype=jnp.float32) * 0.1
    b1 = jax.random.normal(k2, (Hid,), dtype=jnp.float32) * 0.1
    w2 = jax.random.normal(k3, (Hid, Cout), dtype=jnp.float32) * 0.1
    b2 = jax.random.normal(k4, (Cout,), dtype=jnp.float32) * 0.1
    sr_scale, sr_bias = 0.8944, -0.4472  # StarReLU learnable scalars (non-trivial)

    # --- module-parity f32 I/O run.
    out = mlp_block_pallas(x, w1, b1, w2, b2, sr_scale, sr_bias)
    out = jax.block_until_ready(out)
    assert out.shape == (N, Cout, H, W)

    # Reference emulating the same bf16-matmul / f32-accumulate path (tight check).
    x2d = jnp.transpose(x, (0, 2, 3, 1)).reshape(-1, Cin).astype(jnp.bfloat16)
    h = jnp.dot(x2d, w1.astype(jnp.bfloat16), preferred_element_type=jnp.float32) + b1
    r2 = jnp.maximum(h, 0.0) ** 2
    y = (jnp.dot(r2.astype(jnp.bfloat16), (sr_scale * w2).astype(jnp.bfloat16),
                 preferred_element_type=jnp.float32)
         + (b2 + sr_bias * jnp.sum(w2, axis=0)))
    ref = jnp.transpose(y.reshape(N, H, W, Cout), (0, 3, 1, 2))
    assert jnp.allclose(out, ref, atol=5e-3, rtol=5e-3), \
        float(jnp.max(jnp.abs(out - ref)))

    # Loose sanity check vs the original full-f32 math.
    x2f = jnp.transpose(x, (0, 2, 3, 1)).reshape(-1, Cin)
    hf = jnp.maximum(x2f @ w1 + b1, 0.0)
    reff = (sr_scale * hf * hf + sr_bias) @ w2 + b2
    reff = jnp.transpose(reff.reshape(N, H, W, Cout), (0, 3, 1, 2))
    assert jnp.allclose(out, reff, atol=5e-2, rtol=5e-2)

    # --- bf16-I/O run (the recommended HBM-halving configuration); also exercises the
    # lane-chunked inner loop via an explicit lane_chunk override.
    out_bf = mlp_block_pallas(x.astype(jnp.bfloat16), w1, b1, w2, b2,
                              sr_scale, sr_bias,
                              out_dtype=jnp.bfloat16, lane_chunk=128)
    out_bf = jax.block_until_ready(out_bf)
    assert out_bf.dtype == jnp.bfloat16
    assert jnp.allclose(out_bf.astype(jnp.float32), ref, atol=3e-2, rtol=3e-2)

    print("KERNEL_OK")
</pallas_src>

<mosaic_0001>
module attributes {stable_mosaic.version = 11 : i64} {
  func.func @kernel(%arg0: i32, %arg1: i32, %arg2: memref<2x4x256xf32, #tpu.memory_space<vmem>>, %arg3: memref<16x4xbf16, #tpu.memory_space<vmem>>, %arg4: memref<16x1xf32, #tpu.memory_space<vmem>>, %arg5: memref<4x16xbf16, #tpu.memory_space<vmem>>, %arg6: memref<4x1xf32, #tpu.memory_space<vmem>>, %arg7: memref<2x4x256xf32, #tpu.memory_space<vmem>>) attributes {dimension_semantics = [#tpu.dimension_semantics<parallel>, #tpu.dimension_semantics<parallel>], iteration_bounds = array<i64: 1, 1>, scalar_prefetch = 0 : i64, scratch_operands = 0 : i64, tpu.core_type = #tpu.core_type<tc>, window_params = [{transform_indices = @transform_0, window_bounds = array<i64: 2, 4, 256>}, {pipeline_mode = #tpu.pipeline_mode<synchronous>, transform_indices = @transform_1, window_bounds = array<i64: 16, 4>}, {pipeline_mode = #tpu.pipeline_mode<synchronous>, transform_indices = @transform_2, window_bounds = array<i64: 16, 1>}, {pipeline_mode = #tpu.pipeline_mode<synchronous>, transform_indices = @transform_3, window_bounds = array<i64: 4, 16>}, {pipeline_mode = #tpu.pipeline_mode<synchronous>, transform_indices = @transform_4, window_bounds = array<i64: 4, 1>}, {transform_indices = @transform_5, window_bounds = array<i64: 2, 4, 256>}]} {
    %c0 = arith.constant 0 : index
    %c0_0 = arith.constant 0 : index
    %c0_1 = arith.constant 0 : index
    %0 = vector.load %arg2[%c0, %c0_0, %c0_1] : memref<2x4x256xf32, #tpu.memory_space<vmem>>, vector<1x4x256xf32>
    %1 = vector.shape_cast %0 : vector<1x4x256xf32> to vector<4x256xf32>
    %2 = arith.truncf %1 : vector<4x256xf32> to vector<4x256xbf16>
    %c0_2 = arith.constant 0 : index
    %c0_3 = arith.constant 0 : index
    %3 = vector.load %arg3[%c0_2, %c0_3] : memref<16x4xbf16, #tpu.memory_space<vmem>>, vector<16x4xbf16>
    %cst = arith.constant dense<0.000000e+00> : vector<16x256xf32>
    %4 = tpu.matmul %3, %2, %cst {dimension_numbers = #tpu.dot_dimension_numbers<[1], [0], [0], [1], [0, 0, 1, 1], [], []>} : vector<16x4xbf16>, vector<4x256xbf16>, vector<16x256xf32> -> vector<16x256xf32>
    %c0_4 = arith.constant 0 : index
    %c0_5 = arith.constant 0 : index
    %5 = vector.load %arg4[%c0_4, %c0_5] : memref<16x1xf32, #tpu.memory_space<vmem>>, vector<16x1xf32>
    %6 = vector.broadcast %5 : vector<16x1xf32> to vector<16x256xf32>
    %7 = arith.addf %4, %6 : vector<16x256xf32>
    %cst_6 = arith.constant 0.000000e+00 : f32
    %8 = vector.broadcast %cst_6 : f32 to vector<16x256xf32>
    %9 = arith.maximumf %7, %8 : vector<16x256xf32>
    %10 = arith.mulf %9, %9 : vector<16x256xf32>
    %11 = arith.truncf %10 : vector<16x256xf32> to vector<16x256xbf16>
    %c0_7 = arith.constant 0 : index
    %c0_8 = arith.constant 0 : index
    %12 = vector.load %arg5[%c0_7, %c0_8] : memref<4x16xbf16, #tpu.memory_space<vmem>>, vector<4x16xbf16>
    %cst_9 = arith.constant dense<0.000000e+00> : vector<4x256xf32>
    %13 = tpu.matmul %12, %11, %cst_9 {dimension_numbers = #tpu.dot_dimension_numbers<[1], [0], [0], [1], [0, 0, 1, 1], [], []>} : vector<4x16xbf16>, vector<16x256xbf16>, vector<4x256xf32> -> vector<4x256xf32>
    %c0_10 = arith.constant 0 : index
    %c0_11 = arith.constant 0 : index
    %14 = vector.load %arg6[%c0_10, %c0_11] : memref<4x1xf32, #tpu.memory_space<vmem>>, vector<4x1xf32>
    %15 = vector.broadcast %14 : vector<4x1xf32> to vector<4x256xf32>
    %16 = arith.addf %13, %15 : vector<4x256xf32>
    %c0_12 = arith.constant 0 : index
    %c0_13 = arith.constant 0 : index
    %c0_14 = arith.constant 0 : index
    %17 = vector.load %arg7[%c0_12, %c0_13, %c0_14] : memref<2x4x256xf32, #tpu.memory_space<vmem>>, vector<1x4x256xf32>
    %18 = vector.shape_cast %17 : vector<1x4x256xf32> to vector<4x256xf32>
    %19 = vector.shape_cast %16 : vector<4x256xf32> to vector<1x4x256xf32>
    tpu.vector_store %arg7[%c0_12, %c0_13, %c0_14], %19 {strides = array<i32>} : memref<2x4x256xf32, #tpu.memory_space<vmem>>, vector<1x4x256xf32>,
    %c1 = arith.constant 1 : index
    %c0_15 = arith.constant 0 : index
    %c0_16 = arith.constant 0 : index
    %20 = vector.load %arg2[%c1, %c0_15, %c0_16] : memref<2x4x256xf32, #tpu.memory_space<vmem>>, vector<1x4x256xf32>
    %21 = vector.shape_cast %20 : vector<1x4x256xf32> to vector<4x256xf32>
    %22 = arith.truncf %21 : vector<4x256xf32> to vector<4x256xbf16>
    %c0_17 = arith.constant 0 : index
    %c0_18 = arith.constant 0 : index
    %23 = vector.load %arg3[%c0_17, %c0_18] : memref<16x4xbf16, #tpu.memory_space<vmem>>, vector<16x4xbf16>
    %cst_19 = arith.constant dense<0.000000e+00> : vector<16x256xf32>
    %24 = tpu.matmul %23, %22, %cst_19 {dimension_numbers = #tpu.dot_dimension_numbers<[1], [0], [0], [1], [0, 0, 1, 1], [], []>} : vector<16x4xbf16>, vector<4x256xbf16>, vector<16x256xf32> -> vector<16x256xf32>
    %c0_20 = arith.constant 0 : index
    %c0_21 = arith.constant 0 : index
    %25 = vector.load %arg4[%c0_20, %c0_21] : memref<16x1xf32, #tpu.memory_space<vmem>>, vector<16x1xf32>
    %26 = vector.broadcast %25 : vector<16x1xf32> to vector<16x256xf32>
    %27 = arith.addf %24, %26 : vector<16x256xf32>
    %cst_22 = arith.constant 0.000000e+00 : f32
    %28 = vector.broadcast %cst_22 : f32 to vector<16x256xf32>
    %29 = arith.maximumf %27, %28 : vector<16x256xf32>
    %30 = arith.mulf %29, %29 : vector<16x256xf32>
    %31 = arith.truncf %30 : vector<16x256xf32> to vector<16x256xbf16>
    %c0_23 = arith.constant 0 : index
    %c0_24 = arith.constant 0 : index
    %32 = vector.load %arg5[%c0_23, %c0_24] : memref<4x16xbf16, #tpu.memory_space<vmem>>, vector<4x16xbf16>
    %cst_25 = arith.constant dense<0.000000e+00> : vector<4x256xf32>
    %33 = tpu.matmul %32, %31, %cst_25 {dimension_numbers = #tpu.dot_dimension_numbers<[1], [0], [0], [1], [0, 0, 1, 1], [], []>} : vector<4x16xbf16>, vector<16x256xbf16>, vector<4x256xf32> -> vector<4x256xf32>
    %c0_26 = arith.constant 0 : index
    %c0_27 = arith.constant 0 : index
    %34 = vector.load %arg6[%c0_26, %c0_27] : memref<4x1xf32, #tpu.memory_space<vmem>>, vector<4x1xf32>
    %35 = vector.broadcast %34 : vector<4x1xf32> to vector<4x256xf32>
    %36 = arith.addf %33, %35 : vector<4x256xf32>
    %c1_28 = arith.constant 1 : index
    %c0_29 = arith.constant 0 : index
    %c0_30 = arith.constant 0 : index
    %37 = vector.load %arg7[%c1_28, %c0_29, %c0_30] : memref<2x4x256xf32, #tpu.memory_space<vmem>>, vector<1x4x256xf32>
    %38 = vector.shape_cast %37 : vector<1x4x256xf32> to vector<4x256xf32>
    %39 = vector.shape_cast %36 : vector<4x256xf32> to vector<1x4x256xf32>
    tpu.vector_store %arg7[%c1_28, %c0_29, %c0_30], %39 {strides = array<i32>} : memref<2x4x256xf32, #tpu.memory_space<vmem>>, vector<1x4x256xf32>,
    return
  }
  func.func @transform_0(%arg0: i32, %arg1: i32) -> (i32, i32, i32) {
    %c0_i32 = arith.constant 0 : i32
    %c0_i32_0 = arith.constant 0 : i32
    return %arg0, %c0_i32, %arg1 : i32, i32, i32
  }
  func.func @transform_1(%arg0: i32, %arg1: i32) -> (i32, i32) {
    %c0_i32 = arith.constant 0 : i32
    %c0_i32_0 = arith.constant 0 : i32
    %c0_i32_1 = arith.constant 0 : i32
    return %c0_i32, %c0_i32_0 : i32, i32
  }
  func.func @transform_2(%arg0: i32, %arg1: i32) -> (i32, i32) {
    %c0_i32 = arith.constant 0 : i32
    %c0_i32_0 = arith.constant 0 : i32
    %c0_i32_1 = arith.constant 0 : i32
    return %c0_i32, %c0_i32_0 : i32, i32
  }
  func.func @transform_3(%arg0: i32, %arg1: i32) -> (i32, i32) {
    %c0_i32 = arith.constant 0 : i32
    %c0_i32_0 = arith.constant 0 : i32
    %c0_i32_1 = arith.constant 0 : i32
    return %c0_i32, %c0_i32_0 : i32, i32
  }
  func.func @transform_4(%arg0: i32, %arg1: i32) -> (i32, i32) {
    %c0_i32 = arith.constant 0 : i32
    %c0_i32_0 = arith.constant 0 : i32
    %c0_i32_1 = arith.constant 0 : i32
    return %c0_i32, %c0_i32_0 : i32, i32
  }
  func.func @transform_5(%arg0: i32, %arg1: i32) -> (i32, i32, i32) {
    %c0_i32 = arith.constant 0 : i32
    %c0_i32_0 = arith.constant 0 : i32
    return %arg0, %c0_i32, %arg1 : i32, i32, i32
  }
}

</mosaic_0001>

<llo_original>
// kernel: tpu_custom_call.1
$region0: #{tpu_custom_call.1}
  #allocation0 [shape = 'u32[]', space=smem, size = 0x4, offset = 0x4, fixed_abs, tag = 'smem constant byte address 0x4 - core index']
  #allocation1 [shape = 'u32[144,128]{1,0:T(1,128)}', space=vmem, size = 0x12000, scoped, tag = 'internal scratch']
  %s0 = inlined_call_operand.vmem [shape: f32[2,4,256], index: 0, kind: input, shape index: {}]
  %s1 = inlined_call_operand.vmem [shape: bf16[16,4], index: 1, kind: input, shape index: {}]
  %s2 = inlined_call_operand.vmem [shape: f32[16,1], index: 2, kind: input, shape index: {}]
  %s3 = inlined_call_operand.vmem [shape: bf16[4,16], index: 3, kind: input, shape index: {}]
  %s4 = inlined_call_operand.vmem [shape: f32[4,1], index: 4, kind: input, shape index: {}]
  %s5 = inlined_call_operand.hbm [shape: f32[2,4,256], index: 5, kind: output, shape index: {}]
  %s6 = sld [smem:[#allocation0]]
  $region30: #{tpu_custom_call.1} parent=0
    _
  %s8 = ssub.s32 1, %s6
  %s9 = scalar_select 0, %s8, %s6
  $region1: #{tpu_custom_call.1} parent=0
    #allocation2 [shape = 'u8[8192]{0}', space=vmem, size = 0x2000, scoped, tag = 'output window, operand 0, single buffered']
    #allocation3 [shape = 's32[1]{0}', space=sflag, size = 0x4, scoped, tag = 'scoped memory for tpu_custom_call.1']
    %10 = vsyncpa [#allocation3], 0
    // Predicated region
    $region2: #{tpu_custom_call.1} parent=1 // pred_check
      _
    $region3: #{tpu_custom_call.1} parent=1 // pred_check_branch
      %12 = sbr.rel (0) target = $region5
    $region4: #{tpu_custom_call.1} parent=1 // pred_region
      _
    $region5: #{tpu_custom_call.1} parent=1 // pred_fallthru
      _
    // Predicated region
    $region6: #{tpu_custom_call.1} parent=1 // pred_check
      _
    $region7: #{tpu_custom_call.1} parent=1 // pred_check_branch
      %14 = sbr.rel (0) target = $region9
    $region8: #{tpu_custom_call.1} parent=1 // pred_region
      _
    $region9: #{tpu_custom_call.1} parent=1 // pred_fallthru
      _
    // Predicated region
    $region10: #{tpu_custom_call.1} parent=1 // pred_check
      _
    $region11: #{tpu_custom_call.1} parent=1 // pred_check_branch
      %16 = sbr.rel (0) target = $region13
    $region12: #{tpu_custom_call.1} parent=1 // pred_region
      _
    $region13: #{tpu_custom_call.1} parent=1 // pred_fallthru
      _
    // Predicated region
    $region14: #{tpu_custom_call.1} parent=1 // pred_check
      _
    $region15: #{tpu_custom_call.1} parent=1 // pred_check_branch
      %18 = sbr.rel (0) target = $region17
    $region16: #{tpu_custom_call.1} parent=1 // pred_region
      _
    $region17: #{tpu_custom_call.1} parent=1 // pred_fallthru
      _
    // Predicated region
    $region18: #{tpu_custom_call.1} parent=1 // pred_check
      _
    $region19: #{tpu_custom_call.1} parent=1 // pred_check_branch
      %20 = sbr.rel (0) target = $region21
    $region20: #{tpu_custom_call.1} parent=1 // pred_region
      _
    $region21: #{tpu_custom_call.1} parent=1 // pred_fallthru
      _
    %v22 = vld [vmem:[%s0] sm:$0xff]
    %v24 = vcombine.high %v22, %v22
    %v26 = vpack.c.bf16 %v22, %v22
    %v27 = vpack.c.bf16 %v24, %v24
    %v28 = vld [vmem:[%s1] sm:$0xf]
    %v29 = vld [vmem:[%s1 + $0x4] sm:$0xf]
    %v30 = vld [vmem:[%s2] sm:$0xff]
    %v31 = vld [vmem:[%s2 + $0x8] sm:$0xff]
    %33 = vset.pattern.permute.xlu0 0
    %34 = vperm.xlu0 %33, %v30
    %v35 = vpop.permute.xlu0 %34
    %38 = vset.pattern.permute.xlu0 0
    %39 = vperm.xlu0 %38, %v31
    %v40 = vpop.permute.xlu0 %39
    %v44 = vunpack.c.l.b16 %v28
    %v45 = vunpack.c.l.b16 %v29
    %v46 = vpack.c.b16 %v45, %v44
    %vm47 = vcmask 31744
    %v49 = vsel %vm47, %v46, 0
    %vm51 = vcmask 1041408
    %v53 = vsel %vm51, %v26, 0
    %v56 = vsel %vm51, %v27, 0
    %58 = vmatprep.subr.bf16.mxu0 %v56
    %59 = vmatpush1.bf16.msra.mxu0 %v53
    %60 = vmatprep.subr.bf16.mxu0 0
    %61 = vmatpush1.bf16.msra.mxu0 0
    %62 = vmatprep.subr.bf16.mxu0 0
    %63 = vmatpush1.bf16.msra.mxu0 0
    %64 = vmatprep.subr.bf16.mxu0 0
    %65 = vmatpush1.bf16.msra.mxu0 0
    %66 = vmatprep.subr.bf16.mxu0 0
    %67 = vmatpush1.bf16.msra.mxu0 0
    %68 = vmatprep.subr.bf16.mxu0 0
    %69 = vmatpush1.bf16.msra.mxu0 0
    %70 = vmatprep.subr.bf16.mxu0 0
    %71 = vmatpush1.bf16.msra.mxu0 0
    %72 = vmatprep.subr.bf16.mxu0 0
    %73 = vmatpush1.bf16.msra.mxu0 0
    %74 = vmatprep.subr.bf16.mxu0 0
    %75 = vmatpush1.bf16.msra.mxu0 0
    %76 = vmatprep.subr.bf16.mxu0 0
    %77 = vmatpush1.bf16.msra.mxu0 0
    %78 = vmatprep.subr.bf16.mxu0 0
    %79 = vmatpush1.bf16.msra.mxu0 0
    %80 = vmatprep.subr.bf16.mxu0 0
    %81 = vmatpush1.bf16.msra.mxu0 0
    %82 = vmatprep.subr.bf16.mxu0 0
    %83 = vmatpush1.bf16.msra.mxu0 0
    %84 = vmatprep.subr.bf16.mxu0 0
    %85 = vmatpush1.bf16.msra.mxu0 0
    %86 = vmatprep.subr.bf16.mxu0 0
    %87 = vmatpush1.bf16.msra.mxu0 0
    %88 = vmatprep.subr.bf16.mxu0 0
    %89 = vmatpush1.bf16.msra.mxu0 0
    %90 = vmatprep.mubr.bf16.mxu0 0
    %91 = vmatmul.mubr.bf16.gmra.mrb[0].mxu0 %v49
    %v92 = vpop.f32.mrb[0].mxu0
    %v93 = vadd.f32 %v35, %v92
    %v94 = vpop.f32.mrb[0].mxu0
    %v95 = vadd.f32 %v35, %v94
    %v96 = vpop.f32.mrb[0].mxu0
    %v97 = vadd.f32 %v40, %v96
    %v98 = vpop.f32.mrb[0].mxu0
    %v99 = vadd.f32 %v40, %v98
    %100 = vdwg.mxu0
    %v101 = vmax.f32 %v93, 0.0
    %v102 = vmax.f32 %v95, 0.0
    %v103 = vmax.f32 %v97, 0.0
    %v104 = vmax.f32 %v99, 0.0
    %v105 = vmul.f32 %v101, %v101
    %v106 = vmul.f32 %v102, %v102
    %v107 = vmul.f32 %v103, %v103
    %v108 = vmul.f32 %v104, %v104
    %v109 = vpack.c.bf16 %v107, %v105
    %v110 = vpack.c.bf16 %v108, %v106
    %v111 = vld [vmem:[%s3] sm:$0x3]
    %v112 = vld [vmem:[%s4] sm:$0xf]
    %114 = vset.pattern.permute.xlu0 0
    %115 = vperm.xlu0 %114, %v112
    %v116 = vpop.permute.xlu0 %115
    %vm118 = vcmask 130048
    %v120 = vsel %vm118, %v111, 0
    %122 = vmatprep.subr.bf16.mxu0 %v110
    %123 = vmatpush1.bf16.msra.mxu0 %v109
    %124 = vmatprep.subr.bf16.mxu0 0
    %125 = vmatpush1.bf16.msra.mxu0 0
    %126 = vmatprep.subr.bf16.mxu0 0
    %127 = vmatpush1.bf16.msra.mxu0 0
    %128 = vmatprep.subr.bf16.mxu0 0
    %129 = vmatpush1.bf16.msra.mxu0 0
    %130 = vmatprep.subr.bf16.mxu0 0
    %131 = vmatpush1.bf16.msra.mxu0 0
    %132 = vmatprep.subr.bf16.mxu0 0
    %133 = vmatpush1.bf16.msra.mxu0 0
    %134 = vmatprep.subr.bf16.mxu0 0
    %135 = vmatpush1.bf16.msra.mxu0 0
    %136 = vmatprep.subr.bf16.mxu0 0
    %137 = vmatpush1.bf16.msra.mxu0 0
    %138 = vmatprep.subr.bf16.mxu0 0
    %139 = vmatpush1.bf16.msra.mxu0 0
    %140 = vmatprep.subr.bf16.mxu0 0
    %141 = vmatpush1.bf16.msra.mxu0 0
    %142 = vmatprep.subr.bf16.mxu0 0
    %143 = vmatpush1.bf16.msra.mxu0 0
    %144 = vmatprep.subr.bf16.mxu0 0
    %145 = vmatpush1.bf16.msra.mxu0 0
    %146 = vmatprep.subr.bf16.mxu0 0
    %147 = vmatpush1.bf16.msra.mxu0 0
    %148 = vmatprep.subr.bf16.mxu0 0
    %149 = vmatpush1.bf16.msra.mxu0 0
    %150 = vmatprep.subr.bf16.mxu0 0
    %151 = vmatpush1.bf16.msra.mxu0 0
    %152 = vmatprep.subr.bf16.mxu0 0
    %153 = vmatpush1.bf16.msra.mxu0 0
    %154 = vmatprep.mubr.bf16.mxu0 0
    %155 = vmatmul.mubr.bf16.gmra.mrb[0].mxu0 %v120
    %v156 = vpop.f32.mrb[0].mxu0
    %v157 = vadd.f32 %v116, %v156
    %v158 = vpop.f32.mrb[0].mxu0
    %v159 = vadd.f32 %v116, %v158
    %v160 = vpop.f32.mrb[0].mxu0
    %v161 = vpop.f32.mrb[0].mxu0
    %162 = vdwg.mxu0
    %v165 = vcombine.low %v157, %v159
    %167 = vst [vmem:[#allocation2] sm:$0xff] %v165
    %s168 = scalar_lea.vmem %s0, 8
    %v169 = vld [vmem:[%s168] sm:$0xff]
    %v171 = vcombine.high %v169, %v169
    %v173 = vpack.c.bf16 %v169, %v169
    %v174 = vpack.c.bf16 %v171, %v171
    %v175 = vld [vmem:[%s1] sm:$0xf]
    %v176 = vld [vmem:[%s1 + $0x4] sm:$0xf]
    %v177 = vld [vmem:[%s2] sm:$0xff]
    %v178 = vld [vmem:[%s2 + $0x8] sm:$0xff]
    %180 = vset.pattern.permute.xlu0 0
    %181 = vperm.xlu0 %180, %v177
    %v182 = vpop.permute.xlu0 %181
    %185 = vset.pattern.permute.xlu0 0
    %186 = vperm.xlu0 %185, %v178
    %v187 = vpop.permute.xlu0 %186
    %v191 = vunpack.c.l.b16 %v175
    %v192 = vunpack.c.l.b16 %v176
    %v193 = vpack.c.b16 %v192, %v191
    %v195 = vsel %vm47, %v193, 0
    %v198 = vsel %vm51, %v173, 0
    %v201 = vsel %vm51, %v174, 0
    %203 = vmatprep.subr.bf16.mxu0 %v201
    %204 = vmatpush1.bf16.msra.mxu0 %v198
    %205 = vmatprep.subr.bf16.mxu0 0
    %206 = vmatpush1.bf16.msra.mxu0 0
    %207 = vmatprep.subr.bf16.mxu0 0
    %208 = vmatpush1.bf16.msra.mxu0 0
    %209 = vmatprep.subr.bf16.mxu0 0
    %210 = vmatpush1.bf16.msra.mxu0 0
    %211 = vmatprep.subr.bf16.mxu0 0
    %212 = vmatpush1.bf16.msra.mxu0 0
    %213 = vmatprep.subr.bf16.mxu0 0
    %214 = vmatpush1.bf16.msra.mxu0 0
    %215 = vmatprep.subr.bf16.mxu0 0
    %216 = vmatpush1.bf16.msra.mxu0 0
    %217 = vmatprep.subr.bf16.mxu0 0
    %218 = vmatpush1.bf16.msra.mxu0 0
    %219 = vmatprep.subr.bf16.mxu0 0
    %220 = vmatpush1.bf16.msra.mxu0 0
    %221 = vmatprep.subr.bf16.mxu0 0
    %222 = vmatpush1.bf16.msra.mxu0 0
    %223 = vmatprep.subr.bf16.mxu0 0
    %224 = vmatpush1.bf16.msra.mxu0 0
    %225 = vmatprep.subr.bf16.mxu0 0
    %226 = vmatpush1.bf16.msra.mxu0 0
    %227 = vmatprep.subr.bf16.mxu0 0
    %228 = vmatpush1.bf16.msra.mxu0 0
    %229 = vmatprep.subr.bf16.mxu0 0
    %230 = vmatpush1.bf16.msra.mxu0 0
    %231 = vmatprep.subr.bf16.mxu0 0
    %232 = vmatpush1.bf16.msra.mxu0 0
    %233 = vmatprep.subr.bf16.mxu0 0
    %234 = vmatpush1.bf16.msra.mxu0 0
    %235 = vmatprep.mubr.bf16.mxu0 0
    %236 = vmatmul.mubr.bf16.gmra.mrb[0].mxu0 %v195
    %v237 = vpop.f32.mrb[0].mxu0
    %v238 = vadd.f32 %v182, %v237
    %v239 = vpop.f32.mrb[0].mxu0
    %v240 = vadd.f32 %v182, %v239
    %v241 = vpop.f32.mrb[0].mxu0
    %v242 = vadd.f32 %v187, %v241
    %v243 = vpop.f32.mrb[0].mxu0
    %v244 = vadd.f32 %v187, %v243
    %245 = vdwg.mxu0
    %v246 = vmax.f32 %v238, 0.0
    %v247 = vmax.f32 %v240, 0.0
    %v248 = vmax.f32 %v242, 0.0
    %v249 = vmax.f32 %v244, 0.0
    %v250 = vmul.f32 %v246, %v246
    %v251 = vmul.f32 %v247, %v247
    %v252 = vmul.f32 %v248, %v248
    %v253 = vmul.f32 %v249, %v249
    %v254 = vpack.c.bf16 %v252, %v250
    %v255 = vpack.c.bf16 %v253, %v251
    %v256 = vld [vmem:[%s3] sm:$0x3]
    %v257 = vld [vmem:[%s4] sm:$0xf]
    %259 = vset.pattern.permute.xlu0 0
    %260 = vperm.xlu0 %259, %v257
    %v261 = vpop.permute.xlu0 %260
    %v264 = vsel %vm118, %v256, 0
    %266 = vmatprep.subr.bf16.mxu0 %v255
    %267 = vmatpush1.bf16.msra.mxu0 %v254
    %268 = vmatprep.subr.bf16.mxu0 0
    %269 = vmatpush1.bf16.msra.mxu0 0
    %270 = vmatprep.subr.bf16.mxu0 0
    %271 = vmatpush1.bf16.msra.mxu0 0
    %272 = vmatprep.subr.bf16.mxu0 0
    %273 = vmatpush1.bf16.msra.mxu0 0
    %274 = vmatprep.subr.bf16.mxu0 0
    %275 = vmatpush1.bf16.msra.mxu0 0
    %276 = vmatprep.subr.bf16.mxu0 0
    %277 = vmatpush1.bf16.msra.mxu0 0
    %278 = vmatprep.subr.bf16.mxu0 0
    %279 = vmatpush1.bf16.msra.mxu0 0
    %280 = vmatprep.subr.bf16.mxu0 0
    %281 = vmatpush1.bf16.msra.mxu0 0
    %282 = vmatprep.subr.bf16.mxu0 0
    %283 = vmatpush1.bf16.msra.mxu0 0
    %284 = vmatprep.subr.bf16.mxu0 0
    %285 = vmatpush1.bf16.msra.mxu0 0
    %286 = vmatprep.subr.bf16.mxu0 0
    %287 = vmatpush1.bf16.msra.mxu0 0
    %288 = vmatprep.subr.bf16.mxu0 0
    %289 = vmatpush1.bf16.msra.mxu0 0
    %290 = vmatprep.subr.bf16.mxu0 0
    %291 = vmatpush1.bf16.msra.mxu0 0
    %292 = vmatprep.subr.bf16.mxu0 0
    %293 = vmatpush1.bf16.msra.mxu0 0
    %294 = vmatprep.subr.bf16.mxu0 0
    %295 = vmatpush1.bf16.msra.mxu0 0
    %296 = vmatprep.subr.bf16.mxu0 0
    %297 = vmatpush1.bf16.msra.mxu0 0
    %298 = vmatprep.mubr.bf16.mxu0 0
    %299 = vmatmul.mubr.bf16.gmra.mrb[0].mxu0 %v264
    %v300 = vpop.f32.mrb[0].mxu0
    %v301 = vadd.f32 %v261, %v300
    %v302 = vpop.f32.mrb[0].mxu0
    %v303 = vadd.f32 %v261, %v302
    %v304 = vpop.f32.mrb[0].mxu0
    %v305 = vpop.f32.mrb[0].mxu0
    %306 = vdwg.mxu0
    %v309 = vcombine.low %v301, %v303
    %s311 = scalar_lea.vmem [#allocation2], 8
    %312 = vst [vmem:[%s311] sm:$0xff] %v309
    // Predicated region
    $region22: #{tpu_custom_call.1} parent=1 // pred_check
      _
    $region23: #{tpu_custom_call.1} parent=1 // pred_check_branch
      %314 = sbr.rel (0) target = $region25
    $region24: #{tpu_custom_call.1} parent=1 // pred_region
      %s316 = ssub.s32 256, 256
      %317 = vsyncadd [#allocation3], %s316
      %s318 = sshll.u32 [#allocation2], 4
      %s319 = int_to_ptr.vmem [resolvable:$true] %s318
      %324 = dma.vmem_to_hbm [thread:$0]  %s319, 256, %s5, [#allocation3], 128, 128, 8
    $region25: #{tpu_custom_call.1} parent=1 // pred_fallthru
      _
    // Predicated region
    $region26: #{tpu_custom_call.1} parent=1 // pred_check
      _
    $region27: #{tpu_custom_call.1} parent=1 // pred_check_branch
      %326 = sbr.rel (0) target = $region29
    $region28: #{tpu_custom_call.1} parent=1 // pred_region
      %327 = dma.done [#allocation3], 256
    $region29: #{tpu_custom_call.1} parent=1 // pred_fallthru
      _
    %328 = vsyncpa [#allocation3], 1

</llo_original>
